<compile_context>
chip_gen: v6e
topology: v6e:2x2x1
jax: 0.10.0
libtpu: 0.0.40
codegen_flags: <defaults>
</compile_context>

<pallas_src>
import jax
import jax.numpy as jnp
from jax import lax
from jax.experimental import pallas as pl
from jax.experimental.pallas import tpu as pltpu


def _nlm_affinity_kernel(in1_ref, in2_ref, out_ref):
    # in1_ref : (c, TL1)  spatial slab of in1 for the current row-tile
    # in2_ref : (c, TL2)  spatial slab of in2 for the current col-tile
    # out_ref : (TL1, TL2)
    # affinity[l1, l2] = sum_c in1[c, l1] * in2[c, l2]  (A^T @ B, c contracted)
    out_ref[...] = lax.dot_general(
        in1_ref[...],
        in2_ref[...],
        dimension_numbers=(((0,), (0,)), ((), ())),  # contract c on both sides
        preferred_element_type=jnp.float32,
    ).astype(out_ref.dtype)


def _vmem_bytes(tl1, tl2, c, in_itemsize, out_itemsize):
    out_bufs = 2 * tl1 * tl2 * out_itemsize       # double-buffered output block
    in_bufs = 2 * c * (tl1 + tl2) * in_itemsize   # double-buffered input slabs
    dot_tmp = tl1 * tl2 * 4                       # possible f32 dot-result temp
    return out_bufs + in_bufs + dot_tmp + (2 << 20)  # + slack


def nlm_wosoft(in1, in2, *, tl1_cap=512, tl2_cap=4096):
    """in1, in2: (n, c, h, w) -> affinity (n, h*w, h*w)."""
    n, c, h, w = in1.shape
    L = h * w
    out_dtype = jnp.result_type(in1.dtype, in2.dtype)
    in_itemsize = jnp.dtype(out_dtype).itemsize
    out_itemsize = jnp.dtype(out_dtype).itemsize

    # Flatten spatial dims (pure view-level glue; the hot bmm runs in-kernel).
    in1_f = in1.reshape(n, c, L).astype(out_dtype)
    in2_f = in2.reshape(n, c, L).astype(out_dtype)

    # ---- Tile selection -----------------------------------------------------
    # Bias toward a long contiguous TL2 (output lane axis) and >=256-row TL1.
    if L < 256:
        # Single full-extent block per batch element: block dims equal the full
        # array dims, so no (8,128) divisibility constraint and no masking.
        TL1 = TL2 = L
    else:
        base = (L // 128) * 128          # largest 128-multiple <= L
        TL1 = min(tl1_cap, base)
        TL2 = min(tl2_cap, base)

    # ---- VMEM budget (explicit, sized from the actual buffers) --------------
    VMEM_CAP = 48 << 20  # stay well under v7x's 64 MiB physical per-TC VMEM
    while _vmem_bytes(TL1, TL2, c, in_itemsize, out_itemsize) > VMEM_CAP and TL2 > 512:
        TL2 = max(512, ((TL2 // 2) // 128) * 128)
    while _vmem_bytes(TL1, TL2, c, in_itemsize, out_itemsize) > VMEM_CAP and TL1 > 256:
        TL1 = max(256, ((TL1 // 2) // 128) * 128)
    budget = _vmem_bytes(TL1, TL2, c, in_itemsize, out_itemsize)
    vmem_limit = int(min(max(budget, 32 << 20), 128 << 20))

    n_row_tiles = pl.cdiv(L, TL1)
    n_col_tiles = pl.cdiv(L, TL2)
    grid = (n, n_row_tiles, n_col_tiles)

    grid_spec = pltpu.PrefetchScalarGridSpec(
        num_scalar_prefetch=0,
        grid=grid,
        in_specs=[
            # (c, TL1) slab of in1; j is innermost, so this block is only
            # re-DMAed when (b, i) changes.
            pl.BlockSpec((None, c, TL1), lambda b, i, j: (b, 0, i)),
            # (c, TL2) slab of in2 (tiny: c*TL2*itemsize bytes per fetch).
            pl.BlockSpec((None, c, TL2), lambda b, i, j: (b, 0, j)),
        ],
        out_specs=pl.BlockSpec((None, TL1, TL2), lambda b, i, j: (b, i, j)),
    )

    # Advisory cost hint: in1 read once, in2 re-read once per row tile,
    # output written once (no wrapper-side copies).
    cost = pl.CostEstimate(
        flops=2 * n * c * L * L,
        transcendentals=0,
        bytes_accessed=int(
            n * c * L * in_itemsize
            + n * n_row_tiles * c * L * in_itemsize
            + n * L * L * out_itemsize
        ),
    )

    return pl.pallas_call(
        _nlm_affinity_kernel,
        out_shape=jax.ShapeDtypeStruct((n, L, L), out_dtype),
        grid_spec=grid_spec,
        compiler_params=pltpu.CompilerParams(
            # All axes independent: megacore parts shard the (b, i, j) space.
            dimension_semantics=("parallel", "parallel", "parallel"),
            vmem_limit_bytes=vmem_limit,
        ),
        cost_estimate=cost,
    )(in1_f, in2_f)


if __name__ == "__main__":
    # NLM_woSoft has no parameters — nothing to initialize.
    key = jax.random.PRNGKey(0)
    k1, k2 = jax.random.split(key)
    n, c, h, w = 2, 4, 16, 16
    in1 = jax.random.normal(k1, (n, c, h, w), dtype=jnp.float32)
    in2 = jax.random.normal(k2, (n, c, h, w), dtype=jnp.float32)

    affinity = nlm_wosoft(in1, in2)
    jax.block_until_ready(affinity)

    # Reference check against plain-JAX einsum (mirrors torch.bmm semantics).
    ref = jnp.einsum(
        "ncl,ncm->nlm", in1.reshape(n, c, -1), in2.reshape(n, c, -1)
    )
    assert affinity.shape == (n, h * w, h * w)
    assert jnp.allclose(affinity, ref, atol=1e-5, rtol=1e-5)

    print("KERNEL_OK")
</pallas_src>

<mosaic_0001>
module attributes {stable_mosaic.version = 11 : i64} {
  func.func @_nlm_affinity_kernel(%arg0: i32, %arg1: i32, %arg2: i32, %arg3: memref<1x4x256xf32, #tpu.memory_space<vmem>>, %arg4: memref<1x4x256xf32, #tpu.memory_space<vmem>>, %arg5: memref<1x256x256xf32, #tpu.memory_space<vmem>>) attributes {dimension_semantics = [#tpu.dimension_semantics<parallel>, #tpu.dimension_semantics<parallel>, #tpu.dimension_semantics<parallel>], iteration_bounds = array<i64: 2, 1, 1>, scalar_prefetch = 0 : i64, scratch_operands = 0 : i64, tpu.core_type = #tpu.core_type<tc>, window_params = [{transform_indices = @transform_0, window_bounds = array<i64: 1, 4, 256>}, {transform_indices = @transform_1, window_bounds = array<i64: 1, 4, 256>}, {transform_indices = @transform_2, window_bounds = array<i64: 1, 256, 256>}]} {
    %c0 = arith.constant 0 : index
    %c0_0 = arith.constant 0 : index
    %c0_1 = arith.constant 0 : index
    %0 = vector.load %arg3[%c0, %c0_0, %c0_1] : memref<1x4x256xf32, #tpu.memory_space<vmem>>, vector<1x4x256xf32>
    %1 = vector.shape_cast %0 : vector<1x4x256xf32> to vector<4x256xf32>
    %c0_2 = arith.constant 0 : index
    %c0_3 = arith.constant 0 : index
    %c0_4 = arith.constant 0 : index
    %2 = vector.load %arg4[%c0_2, %c0_3, %c0_4] : memref<1x4x256xf32, #tpu.memory_space<vmem>>, vector<1x4x256xf32>
    %3 = vector.shape_cast %2 : vector<1x4x256xf32> to vector<4x256xf32>
    %cst = arith.constant dense<0.000000e+00> : vector<256x256xf32>
    %4 = tpu.matmul %1, %3, %cst {dimension_numbers = #tpu.dot_dimension_numbers<[0], [0], [1], [1], [0, 1, 1, 1], [], []>} : vector<4x256xf32>, vector<4x256xf32>, vector<256x256xf32> -> vector<256x256xf32>
    %c0_5 = arith.constant 0 : index
    %c0_6 = arith.constant 0 : index
    %c0_7 = arith.constant 0 : index
    %5 = vector.load %arg5[%c0_5, %c0_6, %c0_7] : memref<1x256x256xf32, #tpu.memory_space<vmem>>, vector<1x256x256xf32>
    %6 = vector.shape_cast %5 : vector<1x256x256xf32> to vector<256x256xf32>
    %7 = vector.shape_cast %4 : vector<256x256xf32> to vector<1x256x256xf32>
    tpu.vector_store %arg5[%c0_5, %c0_6, %c0_7], %7 {strides = array<i32>} : memref<1x256x256xf32, #tpu.memory_space<vmem>>, vector<1x256x256xf32>,
    return
  }
  func.func @transform_0(%arg0: i32, %arg1: i32, %arg2: i32) -> (i32, i32, i32) {
    %c0_i32 = arith.constant 0 : i32
    %c0_i32_0 = arith.constant 0 : i32
    return %arg0, %c0_i32, %arg1 : i32, i32, i32
  }
  func.func @transform_1(%arg0: i32, %arg1: i32, %arg2: i32) -> (i32, i32, i32) {
    %c0_i32 = arith.constant 0 : i32
    %c0_i32_0 = arith.constant 0 : i32
    return %arg0, %c0_i32, %arg2 : i32, i32, i32
  }
  func.func @transform_2(%arg0: i32, %arg1: i32, %arg2: i32) -> (i32, i32, i32) {
    %c0_i32 = arith.constant 0 : i32
    return %arg0, %arg1, %arg2 : i32, i32, i32
  }
}

</mosaic_0001>

<llo_original>
// kernel: tpu_custom_call.1
$region0: #{tpu_custom_call.1}
  #allocation0 [shape = 'u32[]', space=smem, size = 0x4, offset = 0x4, fixed_abs, tag = 'smem constant byte address 0x4 - core index']
  #allocation1 [shape = 'u32[144,128]{1,0:T(1,128)}', space=vmem, size = 0x12000, scoped, tag = 'internal scratch']
  %s0 = inlined_call_operand.hbm [shape: f32[2,4,256], index: 0, kind: input, shape index: {}]
  %s1 = inlined_call_operand.hbm [shape: f32[2,4,256], index: 1, kind: input, shape index: {}]
  %s2 = inlined_call_operand.hbm [shape: f32[2,256,256], index: 2, kind: output, shape index: {}]
  %s3 = sld [smem:[#allocation0]]
  $region49: #{tpu_custom_call.1} parent=0
    _
  %s5 = ssub.s32 1, %s3
  %s6 = scalar_select 0, %s5, %s3
  $region1: #{tpu_custom_call.1} parent=0
    #allocation2 [shape = 'u8[8192]{0}', space=vmem, size = 0x2000, scoped, tag = 'input window, operand 0']
    #allocation3 [shape = 's32[2]{0}', space=sflag, size = 0x8, scoped, tag = 'scoped memory for tpu_custom_call.1']
    #allocation4 [shape = 's32[2]{0}', space=sflag, size = 0x8, scoped, tag = 'scoped memory for tpu_custom_call.1']
    #allocation5 [shape = 'u8[8192]{0}', space=vmem, size = 0x2000, scoped, tag = 'input window, operand 1']
    #allocation6 [shape = 's32[2]{0}', space=sflag, size = 0x8, scoped, tag = 'scoped memory for tpu_custom_call.1']
    #allocation7 [shape = 'u8[524288]{0}', space=vmem, size = 0x80000, scoped, tag = 'output window, operand 0']
    %7 = vsyncpa [#allocation3], 0
    %s8 = scalar_lea.sflag [#allocation3], 1
    %9 = vsyncpa %s8, 0
    %10 = vsyncpa [#allocation6], 0
    %s11 = scalar_lea.sflag [#allocation6], 1
    %12 = vsyncpa %s11, 0
    %13 = vsyncpa [#allocation4], 0
    %s14 = scalar_lea.sflag [#allocation4], 1
    %15 = vsyncpa %s14, 0
    loop: start=0, step=1, limit=4
    $region2: #{tpu_custom_call.1} parent=1 // loop_pre_header
      _
    $region3: #{tpu_custom_call.1} parent=1 // loop_header
      %s17 = sphi 0, %s21
      %p18 = scmp.ge.s32.totalorder %s17, 4
      %s24 = sphi 0, %s43
      %s25 = sphi 0, %s39
      %s26 = sphi 0, %s35
      %s27 = sphi 0, %s24
      %s28 = sphi 0, %s25
      %s29 = sphi 0, %s26
      %s30 = sphi 0, %s27
      %s31 = sphi 0, %s28
      %s32 = sphi 0, %s29
      %s48 = sphi 0, %s50
      %s51 = sphi 0, %s48
      %s52 = sphi 0, %s51
      %s68 = sphi 0, %s52
      %s76 = sphi 0, %s78
      %s79 = sphi 0, %s76
      %s80 = sphi 0, %s79
      %s96 = sphi 0, %s80
      %s106 = sphi 0, %s108
      %s109 = sphi 0, %s106
      %s110 = sphi 0, %s109
      %s126 = sphi 0, %s110
    $region4: #{tpu_custom_call.1} parent=1 // loop_header_branch
      %20 = sbr.rel (%p18) target = $region8
    $region5: #{tpu_custom_call.1} parent=1 // loop_body
      %s22 = ssub.s32 %s17, 1
      %s23 = ssub.s32 %s17, 2
      %s33 = sadd.s32 1, %s26
      %p34 = scmp.ge.s32.totalorder %s33, 1
      %s35 = scalar_select %p34, 0, %s33
      %s36 = sadd.s32 1, %s25
      %s37 = scalar_select %p34, %s36, %s25
      %p38 = scmp.ge.s32.totalorder %s37, 1
      %s39 = scalar_select %p38, 0, %s37
      %s40 = sadd.s32 1, %s24
      %s41 = scalar_select %p38, %s40, %s24
      %p42 = scmp.ge.s32.totalorder %s41, 2
      %s43 = scalar_select %p42, 0, %s41
      %s44 = ssub.s32 %s24, %s43
      %s45 = ssub.s32 %s25, %s39
      %s46 = sor.u32 %s44, %s45
      %p47 = scmp.eq.s32.totalorder %s46, 0
      %s49 = sadd.s32 %s48, 1
      %s50 = scalar_select %p47, %s48, %s49
      %p53 = pneg %p47
      %p54 = scmp.eq.s32.totalorder %s17, 1
      %p55 = por %p53, %p54
      %p56 = scmp.ne.s32.totalorder %s48, %s51
      %p57 = scmp.eq.s32.totalorder %s17, 0
      %p58 = por %p56, %p57
      %p59 = scmp.ne.s32.totalorder %s48, %s51
      %p60 = scmp.eq.s32.totalorder %s22, 1
      %p61 = por %p59, %p60
      %p62 = scmp.ne.s32.totalorder %s51, %s52
      %p63 = scmp.eq.s32.totalorder %s22, 0
      %p64 = por %p62, %p63
      %p65 = scmp.ne.s32.totalorder %s51, %s52
      %p66 = scmp.eq.s32.totalorder %s23, 1
      %p67 = por %p65, %p66
      %p69 = scmp.ne.s32.totalorder %s52, %s68
      %p70 = scmp.eq.s32.totalorder %s23, 0
      %p71 = por %p69, %p70
      %s72 = ssub.s32 %s24, %s43
      %s73 = ssub.s32 %s26, %s35
      %s74 = sor.u32 %s72, %s73
      %p75 = scmp.eq.s32.totalorder %s74, 0
      %s77 = sadd.s32 %s76, 1
      %s78 = scalar_select %p75, %s76, %s77
      %p81 = pneg %p75
      %p82 = scmp.eq.s32.totalorder %s17, 1
      %p83 = por %p81, %p82
      %p84 = scmp.ne.s32.totalorder %s76, %s79
      %p85 = scmp.eq.s32.totalorder %s17, 0
      %p86 = por %p84, %p85
      %p87 = scmp.ne.s32.totalorder %s76, %s79
      %p88 = scmp.eq.s32.totalorder %s22, 1
      %p89 = por %p87, %p88
      %p90 = scmp.ne.s32.totalorder %s79, %s80
      %p91 = scmp.eq.s32.totalorder %s22, 0
      %p92 = por %p90, %p91
      %p93 = scmp.ne.s32.totalorder %s79, %s80
      %p94 = scmp.eq.s32.totalorder %s23, 1
      %p95 = por %p93, %p94
      %p97 = scmp.ne.s32.totalorder %s80, %s96
      %p98 = scmp.eq.s32.totalorder %s23, 0
      %p99 = por %p97, %p98
      %s100 = ssub.s32 %s24, %s43
      %s101 = ssub.s32 %s25, %s39
      %s102 = sor.u32 %s100, %s101
      %s103 = ssub.s32 %s26, %s35
      %s104 = sor.u32 %s102, %s103
      %p105 = scmp.eq.s32.totalorder %s104, 0
      %s107 = sadd.s32 %s106, 1
      %s108 = scalar_select %p105, %s106, %s107
      %p111 = pneg %p105
      %p112 = scmp.eq.s32.totalorder %s17, 1
      %p113 = por %p111, %p112
      %p114 = scmp.ne.s32.totalorder %s106, %s109
      %p115 = scmp.eq.s32.totalorder %s17, 0
      %p116 = por %p114, %p115
      %p117 = scmp.ne.s32.totalorder %s106, %s109
      %p118 = scmp.eq.s32.totalorder %s22, 1
      %p119 = por %p117, %p118
      %p120 = scmp.ne.s32.totalorder %s109, %s110
      %p121 = scmp.eq.s32.totalorder %s22, 0
      %p122 = por %p120, %p121
      %p123 = scmp.ne.s32.totalorder %s109, %s110
      %p124 = scmp.eq.s32.totalorder %s23, 1
      %p125 = por %p123, %p124
      %p127 = scmp.ne.s32.totalorder %s110, %s126
      %p128 = scmp.eq.s32.totalorder %s23, 0
      %p129 = por %p127, %p128
      %p130 = scmp.le.s32.totalorder 1, %s17
      %p131 = scmp.lt.s32.totalorder %s17, 3
      %p132 = pnand %p130, %p131
      %p133 = pneg %p132
      // Predicated region
      $region9: #{tpu_custom_call.1} parent=5 // pred_check
        _
      $region10: #{tpu_custom_call.1} parent=5 // pred_check_branch
        %135 = sbr.rel (%p132) target = $region12
      $region11: #{tpu_custom_call.1} parent=5 // pred_region
        %s136 = ssub.s32 %s17, 1
      $region12: #{tpu_custom_call.1} parent=5 // pred_fallthru
        _
      %p137 = scmp.lt.s32.totalorder %s17, 2
      // Predicated region
      $region13: #{tpu_custom_call.1} parent=5 // pred_check
        %p138 = pneg %p137
      $region14: #{tpu_custom_call.1} parent=5 // pred_check_branch
        %140 = sbr.rel (%p138) target = $region16
      $region15: #{tpu_custom_call.1} parent=5 // pred_region
        // Predicated region
        $region17: #{tpu_custom_call.1} parent=15 // pred_check
          %p141 = pneg %p58
        $region18: #{tpu_custom_call.1} parent=15 // pred_check_branch
          %143 = sbr.rel (%p141) target = $region20
        $region19: #{tpu_custom_call.1} parent=15 // pred_region
          %s144 = sand.u32 %s48, 1
          %s145 = scalar_lea.sflag [#allocation3], %s144
          %s146 = sand.u32 %s48, 1
          %s147 = smul.addr %s146, 8
          %s148 = scalar_lea.vmem [#allocation2], %s147
          %s149 = smul.u32 2, %s25
          %s151 = ssub.s32 128, 128
          %152 = vsyncadd %s145, %s151
          %s153 = smul.addr %s24, 2
          %s154 = sadd.s32 %s149, %s153
          %s155 = smul.addr %s154, 64
          %s156 = scalar_lea.hbm %s0, %s155
          %s158 = sshll.u32 %s148, 4
          %s159 = int_to_ptr.vmem [resolvable:$true] %s158
          %161 = dma.hbm_to_vmem [thread:$0]  %s156, 128, %s159, %s145
        $region20: #{tpu_custom_call.1} parent=15 // pred_fallthru
          _
        // Predicated region
        $region21: #{tpu_custom_call.1} parent=15 // pred_check
          %p162 = pneg %p86
        $region22: #{tpu_custom_call.1} parent=15 // pred_check_branch
          %164 = sbr.rel (%p162) target = $region24
        $region23: #{tpu_custom_call.1} parent=15 // pred_region
          %s165 = sand.u32 %s76, 1
          %s166 = scalar_lea.sflag [#allocation6], %s165
          %s167 = sand.u32 %s76, 1
          %s168 = smul.addr %s167, 8
          %s169 = scalar_lea.vmem [#allocation5], %s168
          %s170 = smul.u32 2, %s26
          %s172 = ssub.s32 128, 128
          %173 = vsyncadd %s166, %s172
          %s174 = smul.addr %s24, 2
          %s175 = sadd.s32 %s170, %s174
          %s176 = smul.addr %s175, 64
          %s177 = scalar_lea.hbm %s1, %s176
          %s179 = sshll.u32 %s169, 4
          %s180 = int_to_ptr.vmem [resolvable:$true] %s179
          %182 = dma.hbm_to_vmem [thread:$0]  %s177, 128, %s180, %s166
        $region24: #{tpu_custom_call.1} parent=15 // pred_fallthru
          _
      $region16: #{tpu_custom_call.1} parent=5 // pred_fallthru
        _
      %p183 = scmp.le.s32.totalorder 1, %s17
      %p184 = scmp.lt.s32.totalorder %s17, 3
      %p185 = pnand %p183, %p184
      %p186 = pneg %p185
      // Predicated region
      $region25: #{tpu_custom_call.1} parent=5 // pred_check
        _
      $region26: #{tpu_custom_call.1} parent=5 // pred_check_branch
        %188 = sbr.rel (%p185) target = $region28
      $region27: #{tpu_custom_call.1} parent=5 // pred_region
        %s189 = ssub.s32 %s17, 1
        %s190 = sand.u32 %s51, 1
        %s191 = scalar_lea.sflag [#allocation3], %s190
        %s192 = sand.u32 %s51, 1
        %s193 = smul.addr %s192, 8
        %s194 = scalar_lea.vmem [#allocation2], %s193
        // Predicated region
        $region29: #{tpu_custom_call.1} parent=27 // pred_check
          %p195 = pneg %p64
        $region30: #{tpu_custom_call.1} parent=27 // pred_check_branch
          %197 = sbr.rel (%p195) target = $region32
        $region31: #{tpu_custom_call.1} parent=27 // pred_region
          %198 = dma.done %s191, 128
        $region32: #{tpu_custom_call.1} parent=27 // pred_fallthru
          _
        %s199 = sand.u32 %s79, 1
        %s200 = scalar_lea.sflag [#allocation6], %s199
        %s201 = sand.u32 %s79, 1
        %s202 = smul.addr %s201, 8
        %s203 = scalar_lea.vmem [#allocation5], %s202
        // Predicated region
        $region33: #{tpu_custom_call.1} parent=27 // pred_check
          %p204 = pneg %p92
        $region34: #{tpu_custom_call.1} parent=27 // pred_check_branch
          %206 = sbr.rel (%p204) target = $region36
        $region35: #{tpu_custom_call.1} parent=27 // pred_region
          %207 = dma.done %s200, 128
        $region36: #{tpu_custom_call.1} parent=27 // pred_fallthru
          _
        %s208 = sand.u32 %s51, 1
        %s209 = scalar_lea.sflag [#allocation3], %s208
        %s210 = sand.u32 %s51, 1
        %s211 = smul.addr %s210, 8
        %s212 = scalar_lea.vmem [#allocation2], %s211
        %p213 = pneg %p64
        %p214 = pneg %p61
        %s215 = sand.u32 %s79, 1
        %s216 = scalar_lea.sflag [#allocation6], %s215
        %s217 = sand.u32 %s79, 1
        %s218 = smul.addr %s217, 8
        %s219 = scalar_lea.vmem [#allocation5], %s218
        %p220 = pneg %p92
        %p221 = pneg %p89
        %p222 = pneg %p122
        %p223 = pneg %p119
        %s224 = sand.u32 %s109, 1
        %s225 = scalar_lea.sflag [#allocation4], %s224
        %s226 = sand.u32 %s109, 1
        %s227 = smul.addr %s226, 512
        %s228 = scalar_lea.vmem [#allocation7], %s227
        %s229 = smul.u32 2, %s28
        %s230 = smul.u32 2, %s29
        %s231 = smul.u32 32, %s28
        %s232 = smul.u32 2, %s29
        %v233 = vld [vmem:[%s194] sm:$0xff]
        %v234 = vld [vmem:[%s203] sm:$0xff]
        %v236 = vcombine.high %v233, %v233
        %238 = vxpose.xlu0.b32.start [1/16] %v233, 128
        %239 = vxpose.xlu0.b32.cont [2/16] 0.0, 128
        %240 = vxpose.xlu0.b32.cont [3/16] 0.0, 128
        %241 = vxpose.xlu0.b32.cont [4/16] 0.0, 128
        %242 = vxpose.xlu0.b32.cont [5/16] 0.0, 128
        %243 = vxpose.xlu0.b32.cont [6/16] 0.0, 128
        %244 = vxpose.xlu0.b32.cont [7/16] 0.0, 128
        %245 = vxpose.xlu0.b32.cont [8/16] 0.0, 128
        %246 = vxpose.xlu0.b32.cont [9/16] 0.0, 128
        %247 = vxpose.xlu0.b32.cont [10/16] 0.0, 128
        %248 = vxpose.xlu0.b32.cont [11/16] 0.0, 128
        %249 = vxpose.xlu0.b32.cont [12/16] 0.0, 128
        %250 = vxpose.xlu0.b32.cont [13/16] 0.0, 128
        %251 = vxpose.xlu0.b32.cont [14/16] 0.0, 128
        %252 = vxpose.xlu0.b32.cont [15/16] 0.0, 128
        %253 = vxpose.xlu0.b32.end [16/16] 0.0, 128
        %v254 = vpop.trf.xlu0
        %v255 = vpop.trf.xlu0
        %v256 = vpop.trf.xlu0
        %v257 = vpop.trf.xlu0
        %v258 = vpop.trf.xlu0
        %v259 = vpop.trf.xlu0
        %v260 = vpop.trf.xlu0
        %v261 = vpop.trf.xlu0
        %v262 = vpop.trf.xlu0
        %v263 = vpop.trf.xlu0
        %v264 = vpop.trf.xlu0
        %v265 = vpop.trf.xlu0
        %v266 = vpop.trf.xlu0
        %v267 = vpop.trf.xlu0
        %v268 = vpop.trf.xlu0
        %v269 = vpop.trf.xlu0
        %270 = vxpose.xlu0.b32.start [1/16] %v236, 128
        %271 = vxpose.xlu0.b32.cont [2/16] 0.0, 128
        %272 = vxpose.xlu0.b32.cont [3/16] 0.0, 128
        %273 = vxpose.xlu0.b32.cont [4/16] 0.0, 128
        %274 = vxpose.xlu0.b32.cont [5/16] 0.0, 128
        %275 = vxpose.xlu0.b32.cont [6/16] 0.0, 128
        %276 = vxpose.xlu0.b32.cont [7/16] 0.0, 128
        %277 = vxpose.xlu0.b32.cont [8/16] 0.0, 128
        %278 = vxpose.xlu0.b32.cont [9/16] 0.0, 128
        %279 = vxpose.xlu0.b32.cont [10/16] 0.0, 128
        %280 = vxpose.xlu0.b32.cont [11/16] 0.0, 128
        %281 = vxpose.xlu0.b32.cont [12/16] 0.0, 128
        %282 = vxpose.xlu0.b32.cont [13/16] 0.0, 128
        %283 = vxpose.xlu0.b32.cont [14/16] 0.0, 128
        %284 = vxpose.xlu0.b32.cont [15/16] 0.0, 128
        %285 = vxpose.xlu0.b32.end [16/16] 0.0, 128
        %v286 = vpop.trf.xlu0
        %v287 = vpop.trf.xlu0
        %v288 = vpop.trf.xlu0
        %v289 = vpop.trf.xlu0
        %v290 = vpop.trf.xlu0
        %v291 = vpop.trf.xlu0
        %v292 = vpop.trf.xlu0
        %v293 = vpop.trf.xlu0
        %v294 = vpop.trf.xlu0
        %v295 = vpop.trf.xlu0
        %v296 = vpop.trf.xlu0
        %v297 = vpop.trf.xlu0
        %v298 = vpop.trf.xlu0
        %v299 = vpop.trf.xlu0
        %v300 = vpop.trf.xlu0
        %v301 = vpop.trf.xlu0
        %v303 = vcombine.high %v234, %v234
        %vm304 = vcmask 31744
        %v306 = vsel %vm304, %v254, 0
        %v309 = vsel %vm304, %v255, 0
        %v312 = vsel %vm304, %v256, 0
        %v315 = vsel %vm304, %v257, 0
        %v318 = vsel %vm304, %v258, 0
        %v321 = vsel %vm304, %v259, 0
        %v324 = vsel %vm304, %v260, 0
        %v327 = vsel %vm304, %v261, 0
        %v330 = vsel %vm304, %v262, 0
        %v333 = vsel %vm304, %v263, 0
        %v336 = vsel %vm304, %v264, 0
        %v339 = vsel %vm304, %v265, 0
        %v342 = vsel %vm304, %v266, 0
        %v345 = vsel %vm304, %v267, 0
        %v348 = vsel %vm304, %v268, 0
        %v351 = vsel %vm304, %v269, 0
        %v354 = vsel %vm304, %v286, 0
        %v357 = vsel %vm304, %v287, 0
        %v360 = vsel %vm304, %v288, 0
        %v363 = vsel %vm304, %v289, 0
        %v366 = vsel %vm304, %v290, 0
        %v369 = vsel %vm304, %v291, 0
        %v372 = vsel %vm304, %v292, 0
        %v375 = vsel %vm304, %v293, 0
        %v378 = vsel %vm304, %v294, 0
        %v381 = vsel %vm304, %v295, 0
        %v384 = vsel %vm304, %v296, 0
        %v387 = vsel %vm304, %v297, 0
        %v390 = vsel %vm304, %v298, 0
        %v393 = vsel %vm304, %v299, 0
        %v396 = vsel %vm304, %v300, 0
        %v399 = vsel %vm304, %v301, 0
        %vm401 = vcmask 1043456
        %v402 = vsel %vm401, %v234, 0
        %v404 = vsel %vm401, %v303, 0
        %406 = vmatprep.subr.mxu0 0.0
        %407 = vmatpush1.msra.mxu0 0.0
        %408 = vmatprep.subr.mxu0 0.0
        %409 = vmatpush1.msra.mxu0 0.0
        %410 = vmatprep.subr.mxu0 0.0
        %411 = vmatpush1.msra.mxu0 0.0
        %412 = vmatprep.subr.mxu0 0.0
        %413 = vmatpush1.msra.mxu0 0.0
        %414 = vmatprep.subr.mxu0 0.0
        %415 = vmatpush1.msra.mxu0 0.0
        %416 = vmatprep.subr.mxu0 0.0
        %417 = vmatpush1.msra.mxu0 0.0
        %418 = vmatprep.subr.mxu0 0.0
        %419 = vmatpush1.msra.mxu0 0.0
        %420 = vmatprep.subr.mxu0 0.0
        %421 = vmatpush1.msra.mxu0 0.0
        %422 = vmatprep.subr.mxu0 0.0
        %423 = vmatpush1.msra.mxu0 0.0
        %424 = vmatprep.subr.mxu0 0.0
        %425 = vmatpush1.msra.mxu0 0.0
        %426 = vmatprep.subr.mxu0 0.0
        %427 = vmatpush1.msra.mxu0 0.0
        %428 = vmatprep.subr.mxu0 0.0
        %429 = vmatpush1.msra.mxu0 0.0
        %430 = vmatprep.subr.mxu0 0.0
        %431 = vmatpush1.msra.mxu0 0.0
        %432 = vmatprep.subr.mxu0 0.0
        %433 = vmatpush1.msra.mxu0 0.0
        %434 = vmatprep.subr.mxu0 0.0
        %435 = vmatpush1.msra.mxu0 0.0
        %436 = vmatprep.subr.mxu0 %v404
        %437 = vmatpush1.msra.mxu0 %v402
        %438 = vmatprep.subr.mxu0 0.0
        %439 = vmatpush2.msra.mxu0 0.0
        %440 = vmatprep.subr.mxu0 0.0
        %441 = vmatpush2.msra.mxu0 0.0
        %442 = vmatprep.subr.mxu0 0.0
        %443 = vmatpush2.msra.mxu0 0.0
        %444 = vmatprep.subr.mxu0 0.0
        %445 = vmatpush2.msra.mxu0 0.0
        %446 = vmatprep.subr.mxu0 0.0
        %447 = vmatpush2.msra.mxu0 0.0
        %448 = vmatprep.subr.mxu0 0.0
        %449 = vmatpush2.msra.mxu0 0.0
        %450 = vmatprep.subr.mxu0 0.0
        %451 = vmatpush2.msra.mxu0 0.0
        %452 = vmatprep.subr.mxu0 0.0
        %453 = vmatpush2.msra.mxu0 0.0
        %454 = vmatprep.subr.mxu0 0.0
        %455 = vmatpush2.msra.mxu0 0.0
        %456 = vmatprep.subr.mxu0 0.0
        %457 = vmatpush2.msra.mxu0 0.0
        %458 = vmatprep.subr.mxu0 0.0
        %459 = vmatpush2.msra.mxu0 0.0
        %460 = vmatprep.subr.mxu0 0.0
        %461 = vmatpush2.msra.mxu0 0.0
        %462 = vmatprep.subr.mxu0 0.0
        %463 = vmatpush2.msra.mxu0 0.0
        %464 = vmatprep.subr.mxu0 0.0
        %465 = vmatpush2.msra.mxu0 0.0
        %466 = vmatprep.subr.mxu0 0.0
        %467 = vmatpush2.msra.mxu0 0.0
        %468 = vmatprep.subr.mxu0 0.0
        %469 = vmatpush2.msra.mxu0 0.0
        %470 = vmatprep.mubr.f32.mxu0 0.0
        %471 = vmatmul.mubr.f32.gmra.mxu0 %v306
        %v472 = vpop.f32.mrf.mxu0
        %v473 = vadd.f32 0.0, %v472
        %v474 = vpop.f32.mrf.mxu0
        %v475 = vadd.f32 0.0, %v474
        %476 = vmatprep.mubr.f32.mxu0 0.0
        %477 = vmatmul.mubr.f32.gmra.mxu0 %v309
        %v478 = vpop.f32.mrf.mxu0
        %v479 = vadd.f32 0.0, %v478
        %v480 = vpop.f32.mrf.mxu0
        %v481 = vadd.f32 0.0, %v480
        %482 = vmatprep.mubr.f32.mxu0 0.0
        %483 = vmatmul.mubr.f32.gmra.mxu0 %v312
        %v484 = vpop.f32.mrf.mxu0
        %v485 = vadd.f32 0.0, %v484
        %v486 = vpop.f32.mrf.mxu0
        %v487 = vadd.f32 0.0, %v486
        %488 = vmatprep.mubr.f32.mxu0 0.0
        %489 = vmatmul.mubr.f32.gmra.mxu0 %v315
        %v490 = vpop.f32.mrf.mxu0
        %v491 = vadd.f32 0.0, %v490
        %v492 = vpop.f32.mrf.mxu0
        %v493 = vadd.f32 0.0, %v492
        %494 = vmatprep.mubr.f32.mxu0 0.0
        %495 = vmatmul.mubr.f32.gmra.mxu0 %v318
        %v496 = vpop.f32.mrf.mxu0
        %v497 = vadd.f32 0.0, %v496
        %v498 = vpop.f32.mrf.mxu0
        %v499 = vadd.f32 0.0, %v498
        %500 = vmatprep.mubr.f32.mxu0 0.0
        %501 = vmatmul.mubr.f32.gmra.mxu0 %v321
        %v502 = vpop.f32.mrf.mxu0
        %v503 = vadd.f32 0.0, %v502
        %v504 = vpop.f32.mrf.mxu0
        %v505 = vadd.f32 0.0, %v504
        %506 = vmatprep.mubr.f32.mxu0 0.0
        %507 = vmatmul.mubr.f32.gmra.mxu0 %v324
        %v508 = vpop.f32.mrf.mxu0
        %v509 = vadd.f32 0.0, %v508
        %v510 = vpop.f32.mrf.mxu0
        %v511 = vadd.f32 0.0, %v510
        %512 = vmatprep.mubr.f32.mxu0 0.0
        %513 = vmatmul.mubr.f32.gmra.mxu0 %v327
        %v514 = vpop.f32.mrf.mxu0
        %v515 = vadd.f32 0.0, %v514
        %v516 = vpop.f32.mrf.mxu0
        %v517 = vadd.f32 0.0, %v516
        %518 = vmatprep.mubr.f32.mxu0 0.0
        %519 = vmatmul.mubr.f32.gmra.mxu0 %v330
        %v520 = vpop.f32.mrf.mxu0
        %v521 = vadd.f32 0.0, %v520
        %v522 = vpop.f32.mrf.mxu0
        %v523 = vadd.f32 0.0, %v522
        %524 = vmatprep.mubr.f32.mxu0 0.0
        %525 = vmatmul.mubr.f32.gmra.mxu0 %v333
        %v526 = vpop.f32.mrf.mxu0
        %v527 = vadd.f32 0.0, %v526
        %v528 = vpop.f32.mrf.mxu0
        %v529 = vadd.f32 0.0, %v528
        %530 = vmatprep.mubr.f32.mxu0 0.0
        %531 = vmatmul.mubr.f32.gmra.mxu0 %v336
        %v532 = vpop.f32.mrf.mxu0
        %v533 = vadd.f32 0.0, %v532
        %v534 = vpop.f32.mrf.mxu0
        %v535 = vadd.f32 0.0, %v534
        %536 = vmatprep.mubr.f32.mxu0 0.0
        %537 = vmatmul.mubr.f32.gmra.mxu0 %v339
        %v538 = vpop.f32.mrf.mxu0
        %v539 = vadd.f32 0.0, %v538
        %v540 = vpop.f32.mrf.mxu0
        %v541 = vadd.f32 0.0, %v540
        %542 = vmatprep.mubr.f32.mxu0 0.0
        %543 = vmatmul.mubr.f32.gmra.mxu0 %v342
        %v544 = vpop.f32.mrf.mxu0
        %v545 = vadd.f32 0.0, %v544
        %v546 = vpop.f32.mrf.mxu0
        %v547 = vadd.f32 0.0, %v546
        %548 = vmatprep.mubr.f32.mxu0 0.0
        %549 = vmatmul.mubr.f32.gmra.mxu0 %v345
        %v550 = vpop.f32.mrf.mxu0
        %v551 = vadd.f32 0.0, %v550
        %v552 = vpop.f32.mrf.mxu0
        %v553 = vadd.f32 0.0, %v552
        %554 = vmatprep.mubr.f32.mxu0 0.0
        %555 = vmatmul.mubr.f32.gmra.mxu0 %v348
        %v556 = vpop.f32.mrf.mxu0
        %v557 = vadd.f32 0.0, %v556
        %v558 = vpop.f32.mrf.mxu0
        %v559 = vadd.f32 0.0, %v558
        %560 = vmatprep.mubr.f32.mxu0 0.0
        %561 = vmatmul.mubr.f32.gmra.mxu0 %v351
        %v562 = vpop.f32.mrf.mxu0
        %v563 = vadd.f32 0.0, %v562
        %v564 = vpop.f32.mrf.mxu0
        %v565 = vadd.f32 0.0, %v564
        %566 = vmatprep.mubr.f32.mxu0 0.0
        %567 = vmatmul.mubr.f32.gmra.mxu0 %v354
        %v568 = vpop.f32.mrf.mxu0
        %v569 = vadd.f32 0.0, %v568
        %v570 = vpop.f32.mrf.mxu0
        %v571 = vadd.f32 0.0, %v570
        %572 = vmatprep.mubr.f32.mxu0 0.0
        %573 = vmatmul.mubr.f32.gmra.mxu0 %v357
        %v574 = vpop.f32.mrf.mxu0
        %v575 = vadd.f32 0.0, %v574
        %v576 = vpop.f32.mrf.mxu0
        %v577 = vadd.f32 0.0, %v576
        %578 = vmatprep.mubr.f32.mxu0 0.0
        %579 = vmatmul.mubr.f32.gmra.mxu0 %v360
        %v580 = vpop.f32.mrf.mxu0
        %v581 = vadd.f32 0.0, %v580
        %v582 = vpop.f32.mrf.mxu0
        %v583 = vadd.f32 0.0, %v582
        %584 = vmatprep.mubr.f32.mxu0 0.0
        %585 = vmatmul.mubr.f32.gmra.mxu0 %v363
        %v586 = vpop.f32.mrf.mxu0
        %v587 = vadd.f32 0.0, %v586
        %v588 = vpop.f32.mrf.mxu0
        %v589 = vadd.f32 0.0, %v588
        %590 = vmatprep.mubr.f32.mxu0 0.0
        %591 = vmatmul.mubr.f32.gmra.mxu0 %v366
        %v592 = vpop.f32.mrf.mxu0
        %v593 = vadd.f32 0.0, %v592
        %v594 = vpop.f32.mrf.mxu0
        %v595 = vadd.f32 0.0, %v594
        %596 = vmatprep.mubr.f32.mxu0 0.0
        %597 = vmatmul.mubr.f32.gmra.mxu0 %v369
        %v598 = vpop.f32.mrf.mxu0
        %v599 = vadd.f32 0.0, %v598
        %v600 = vpop.f32.mrf.mxu0
        %v601 = vadd.f32 0.0, %v600
        %602 = vmatprep.mubr.f32.mxu0 0.0
        %603 = vmatmul.mubr.f32.gmra.mxu0 %v372
        %v604 = vpop.f32.mrf.mxu0
        %v605 = vadd.f32 0.0, %v604
        %v606 = vpop.f32.mrf.mxu0
        %v607 = vadd.f32 0.0, %v606
        %608 = vmatprep.mubr.f32.mxu0 0.0
        %609 = vmatmul.mubr.f32.gmra.mxu0 %v375
        %v610 = vpop.f32.mrf.mxu0
        %v611 = vadd.f32 0.0, %v610
        %v612 = vpop.f32.mrf.mxu0
        %v613 = vadd.f32 0.0, %v612
        %614 = vmatprep.mubr.f32.mxu0 0.0
        %615 = vmatmul.mubr.f32.gmra.mxu0 %v378
        %v616 = vpop.f32.mrf.mxu0
        %v617 = vadd.f32 0.0, %v616
        %v618 = vpop.f32.mrf.mxu0
        %v619 = vadd.f32 0.0, %v618
        %620 = vmatprep.mubr.f32.mxu0 0.0
        %621 = vmatmul.mubr.f32.gmra.mxu0 %v381
        %v622 = vpop.f32.mrf.mxu0
        %v623 = vadd.f32 0.0, %v622
        %v624 = vpop.f32.mrf.mxu0
        %v625 = vadd.f32 0.0, %v624
        %626 = vmatprep.mubr.f32.mxu0 0.0
        %627 = vmatmul.mubr.f32.gmra.mxu0 %v384
        %v628 = vpop.f32.mrf.mxu0
        %v629 = vadd.f32 0.0, %v628
        %v630 = vpop.f32.mrf.mxu0
        %v631 = vadd.f32 0.0, %v630
        %632 = vmatprep.mubr.f32.mxu0 0.0
        %633 = vmatmul.mubr.f32.gmra.mxu0 %v387
        %v634 = vpop.f32.mrf.mxu0
        %v635 = vadd.f32 0.0, %v634
        %v636 = vpop.f32.mrf.mxu0
        %v637 = vadd.f32 0.0, %v636
        %638 = vmatprep.mubr.f32.mxu0 0.0
        %639 = vmatmul.mubr.f32.gmra.mxu0 %v390
        %v640 = vpop.f32.mrf.mxu0
        %v641 = vadd.f32 0.0, %v640
        %v642 = vpop.f32.mrf.mxu0
        %v643 = vadd.f32 0.0, %v642
        %644 = vmatprep.mubr.f32.mxu0 0.0
        %645 = vmatmul.mubr.f32.gmra.mxu0 %v393
        %v646 = vpop.f32.mrf.mxu0
        %v647 = vadd.f32 0.0, %v646
        %v648 = vpop.f32.mrf.mxu0
        %v649 = vadd.f32 0.0, %v648
        %650 = vmatprep.mubr.f32.mxu0 0.0
        %651 = vmatmul.mubr.f32.gmra.mxu0 %v396
        %v652 = vpop.f32.mrf.mxu0
        %v653 = vadd.f32 0.0, %v652
        %v654 = vpop.f32.mrf.mxu0
        %v655 = vadd.f32 0.0, %v654
        %656 = vmatprep.mubr.f32.mxu0 0.0
        %657 = vmatmul.mubr.f32.gmra.mxu0 %v399
        %v658 = vpop.f32.mrf.mxu0
        %v659 = vadd.f32 0.0, %v658
        %v660 = vpop.f32.mrf.mxu0
        %v661 = vadd.f32 0.0, %v660
        %662 = vdwg.mxu0
        %663 = vst [vmem:[%s228] sm:$0xff] %v473
        %664 = vst [vmem:[%s228 + $0x8] sm:$0xff] %v475
        %665 = vst [vmem:[%s228 + $0x10] sm:$0xff] %v479
        %666 = vst [vmem:[%s228 + $0x18] sm:$0xff] %v481
        %667 = vst [vmem:[%s228 + $0x20] sm:$0xff] %v485
        %668 = vst [vmem:[%s228 + $0x28] sm:$0xff] %v487
        %669 = vst [vmem:[%s228 + $0x30] sm:$0xff] %v491
        %670 = vst [vmem:[%s228 + $0x38] sm:$0xff] %v493
        %671 = vst [vmem:[%s228 + $0x40] sm:$0xff] %v497
        %672 = vst [vmem:[%s228 + $0x48] sm:$0xff] %v499
        %673 = vst [vmem:[%s228 + $0x50] sm:$0xff] %v503
        %674 = vst [vmem:[%s228 + $0x58] sm:$0xff] %v505
        %675 = vst [vmem:[%s228 + $0x60] sm:$0xff] %v509
        %676 = vst [vmem:[%s228 + $0x68] sm:$0xff] %v511
        %677 = vst [vmem:[%s228 + $0x70] sm:$0xff] %v515
        %678 = vst [vmem:[%s228 + $0x78] sm:$0xff] %v517
        %679 = vst [vmem:[%s228 + $0x80] sm:$0xff] %v521
        %680 = vst [vmem:[%s228 + $0x88] sm:$0xff] %v523
        %681 = vst [vmem:[%s228 + $0x90] sm:$0xff] %v527
        %682 = vst [vmem:[%s228 + $0x98] sm:$0xff] %v529
        %683 = vst [vmem:[%s228 + $0xa0] sm:$0xff] %v533
        %684 = vst [vmem:[%s228 + $0xa8] sm:$0xff] %v535
        %685 = vst [vmem:[%s228 + $0xb0] sm:$0xff] %v539
        %686 = vst [vmem:[%s228 + $0xb8] sm:$0xff] %v541
        %687 = vst [vmem:[%s228 + $0xc0] sm:$0xff] %v545
        %688 = vst [vmem:[%s228 + $0xc8] sm:$0xff] %v547
        %689 = vst [vmem:[%s228 + $0xd0] sm:$0xff] %v551
        %690 = vst [vmem:[%s228 + $0xd8] sm:$0xff] %v553
        %691 = vst [vmem:[%s228 + $0xe0] sm:$0xff] %v557
        %692 = vst [vmem:[%s228 + $0xe8] sm:$0xff] %v559
        %693 = vst [vmem:[%s228 + $0xf0] sm:$0xff] %v563
        %694 = vst [vmem:[%s228 + $0xf8] sm:$0xff] %v565
        %695 = vst [vmem:[%s228 + $0x100] sm:$0xff] %v569
        %696 = vst [vmem:[%s228 + $0x108] sm:$0xff] %v571
        %697 = vst [vmem:[%s228 + $0x110] sm:$0xff] %v575
        %698 = vst [vmem:[%s228 + $0x118] sm:$0xff] %v577
        %699 = vst [vmem:[%s228 + $0x120] sm:$0xff] %v581
        %700 = vst [vmem:[%s228 + $0x128] sm:$0xff] %v583
        %701 = vst [vmem:[%s228 + $0x130] sm:$0xff] %v587
        %702 = vst [vmem:[%s228 + $0x138] sm:$0xff] %v589
        %703 = vst [vmem:[%s228 + $0x140] sm:$0xff] %v593
        %704 = vst [vmem:[%s228 + $0x148] sm:$0xff] %v595
        %705 = vst [vmem:[%s228 + $0x150] sm:$0xff] %v599
        %706 = vst [vmem:[%s228 + $0x158] sm:$0xff] %v601
        %707 = vst [vmem:[%s228 + $0x160] sm:$0xff] %v605
        %708 = vst [vmem:[%s228 + $0x168] sm:$0xff] %v607
        %709 = vst [vmem:[%s228 + $0x170] sm:$0xff] %v611
        %710 = vst [vmem:[%s228 + $0x178] sm:$0xff] %v613
        %711 = vst [vmem:[%s228 + $0x180] sm:$0xff] %v617
        %712 = vst [vmem:[%s228 + $0x188] sm:$0xff] %v619
        %713 = vst [vmem:[%s228 + $0x190] sm:$0xff] %v623
        %714 = vst [vmem:[%s228 + $0x198] sm:$0xff] %v625
        %715 = vst [vmem:[%s228 + $0x1a0] sm:$0xff] %v629
        %716 = vst [vmem:[%s228 + $0x1a8] sm:$0xff] %v631
        %717 = vst [vmem:[%s228 + $0x1b0] sm:$0xff] %v635
        %718 = vst [vmem:[%s228 + $0x1b8] sm:$0xff] %v637
        %719 = vst [vmem:[%s228 + $0x1c0] sm:$0xff] %v641
        %720 = vst [vmem:[%s228 + $0x1c8] sm:$0xff] %v643
        %721 = vst [vmem:[%s228 + $0x1d0] sm:$0xff] %v647
        %722 = vst [vmem:[%s228 + $0x1d8] sm:$0xff] %v649
        %723 = vst [vmem:[%s228 + $0x1e0] sm:$0xff] %v653
        %724 = vst [vmem:[%s228 + $0x1e8] sm:$0xff] %v655
        %725 = vst [vmem:[%s228 + $0x1f0] sm:$0xff] %v659
        %726 = vst [vmem:[%s228 + $0x1f8] sm:$0xff] %v661
        %s727 = sand.u32 %s109, 1
        %s728 = scalar_lea.sflag [#allocation4], %s727
        %s729 = sand.u32 %s109, 1
        %s730 = smul.addr %s729, 512
        %s731 = scalar_lea.vmem [#allocation7], %s730
        // Predicated region
        $region37: #{tpu_custom_call.1} parent=27 // pred_check
          %p732 = pneg %p119
        $region38: #{tpu_custom_call.1} parent=27 // pred_check_branch
          %734 = sbr.rel (%p732) target = $region40
        $region39: #{tpu_custom_call.1} parent=27 // pred_region
          %s735 = smul.u32 32, %s28
          %s736 = smul.u32 2, %s29
          %s738 = ssub.s32 8192, 8192
          %739 = vsyncadd %s728, %s738
          %s740 = smul.addr %s735, 2
          %s741 = sadd.s32 %s736, %s740
          %s742 = smul.addr %s27, 64
          %s743 = sadd.s32 %s741, %s742
          %s744 = smul.addr %s743, 128
          %s745 = scalar_lea.hbm %s2, %s744
          %s746 = sshll.u32 %s731, 4
          %s747 = int_to_ptr.vmem [resolvable:$true] %s746
          %752 = dma.vmem_to_hbm [thread:$0]  %s747, 8192, %s745, %s728, 256, 256, 16
        $region40: #{tpu_custom_call.1} parent=27 // pred_fallthru
          _
      $region28: #{tpu_custom_call.1} parent=5 // pred_fallthru
        _
      %p753 = scmp.le.s32.totalorder 2, %s17
      // Predicated region
      $region41: #{tpu_custom_call.1} parent=5 // pred_check
        %p754 = pneg %p753
      $region42: #{tpu_custom_call.1} parent=5 // pred_check_branch
        %756 = sbr.rel (%p754) target = $region44
      $region43: #{tpu_custom_call.1} parent=5 // pred_region
        %s757 = ssub.s32 %s17, 2
        // Predicated region
        $region45: #{tpu_custom_call.1} parent=43 // pred_check
          %p758 = pneg %p125
        $region46: #{tpu_custom_call.1} parent=43 // pred_check_branch
          %760 = sbr.rel (%p758) target = $region48
        $region47: #{tpu_custom_call.1} parent=43 // pred_region
          %s761 = sand.u32 %s110, 1
          %s762 = scalar_lea.sflag [#allocation4], %s761
          %s763 = sand.u32 %s110, 1
          %s764 = smul.addr %s763, 512
          %s765 = scalar_lea.vmem [#allocation7], %s764
          %766 = dma.done %s762, 8192
        $region48: #{tpu_custom_call.1} parent=43 // pred_fallthru
          _
      $region44: #{tpu_custom_call.1} parent=5 // pred_fallthru
        _
    $region6: #{tpu_custom_call.1} parent=1 // loop_footer
      %s21 = sadd.s32 1, %s17
    $region7: #{tpu_custom_call.1} parent=1 // loop_footer_branch
      %16 = sbr.rel target = $region3
    $region8: #{tpu_custom_call.1} parent=1 // loop_exit
      _
    %767 = vsyncpa [#allocation3], 1
    %s768 = scalar_lea.sflag [#allocation3], 1
    %769 = vsyncpa %s768, 1
    %770 = vsyncpa [#allocation6], 1
    %s771 = scalar_lea.sflag [#allocation6], 1
    %772 = vsyncpa %s771, 1
    %773 = vsyncpa [#allocation4], 1
    %s774 = scalar_lea.sflag [#allocation4], 1
    %775 = vsyncpa %s774, 1

</llo_original>
